<compile_context>
chip_gen: v7x
topology: tpu7x:2x2x1
jax: 0.10.0
libtpu: 0.0.40
codegen_flags: <defaults>
</compile_context>

<pallas_src>
import functools

import jax
import jax.numpy as jnp
from jax.experimental import pallas as pl
from jax.experimental.pallas import tpu as pltpu


NEG_SLOPE = 0.01  # F.leaky_relu default negative slope


def _policy_kernel(x_ref, w1_ref, b1_ref, w2_ref, b2_ref, w3_ref, b3_ref,
                   scale_ref, bias_ref, out_ref):
    x = x_ref[...]

    # layer1 + leaky_relu (maximum form: mul + vmax, cheaper than cmp+sel+mul)
    h = jnp.dot(x, w1_ref[...], preferred_element_type=jnp.float32) + b1_ref[...]
    h = jnp.maximum(h, NEG_SLOPE * h)

    # layer2 + leaky_relu
    h = jnp.dot(h, w2_ref[...], preferred_element_type=jnp.float32) + b2_ref[...]
    h = jnp.maximum(h, NEG_SLOPE * h)

    # layer3 + sigmoid (logistic routes to the EUP slot)
    y = jnp.dot(h, w3_ref[...], preferred_element_type=jnp.float32) + b3_ref[...]
    y = jax.nn.sigmoid(y)

    # x[:, :n_actions] * scale_factor + bias_factor
    # (layer3 already outputs exactly n_actions columns, so the slice is identity;
    #  this is asserted in the wrapper.)
    out_ref[...] = y * scale_ref[...] + bias_ref[...]


def deterministic_policy_forward(x, params, tile_b=512):
    """x: [B, n_states] float32 -> [B, n_actions] float32."""
    w1t, b1, w2t, b2, w3t, b3, scale, bias = params
    B, n_states = x.shape
    hidden = w1t.shape[1]
    n_actions = w3t.shape[1]
    # The module's slice x[:, :n_actions] is identity only when layer3's width
    # equals the scale/bias width; enforce it so kernel == PyTorch reference.
    assert n_actions == scale.shape[1] == bias.shape[1], \
        "layer3 out_features must equal len(scale_factor)/len(bias_factor)"

    # --- batch tiling: TB rows per grid step, pad B up to a multiple of TB ---
    TB = min(tile_b, B)
    if B > TB:
        pad = (-B) % TB
        x_in = jnp.pad(x, ((0, pad), (0, 0))) if pad else x
    else:
        x_in = x
    Bp = x_in.shape[0]
    n_blocks = pl.cdiv(Bp, TB)

    # Weights / biases / constants: constant index_map -> DMA'd once, stay in VMEM.
    resident = lambda arr: pl.BlockSpec(arr.shape, lambda i: (0,) * arr.ndim)

    flops = 2 * B * (n_states * hidden + hidden * hidden + hidden * n_actions)
    bytes_accessed = 4 * (
        B * n_states                       # x
        + n_states * hidden + hidden       # layer1
        + hidden * hidden + hidden         # layer2
        + hidden * n_actions + n_actions   # layer3
        + 2 * n_actions                    # scale, bias
        + B * n_actions                    # out
    )

    out = pl.pallas_call(
        _policy_kernel,
        out_shape=jax.ShapeDtypeStruct((Bp, n_actions), jnp.float32),
        grid=(n_blocks,),
        in_specs=[
            pl.BlockSpec((TB, n_states), lambda i: (i, 0)),   # x tile
            resident(w1t), resident(b1),
            resident(w2t), resident(b2),
            resident(w3t), resident(b3),
            resident(scale), resident(bias),
        ],
        out_specs=pl.BlockSpec((TB, n_actions), lambda i: (i, 0)),
        compiler_params=pltpu.CompilerParams(
            dimension_semantics=("parallel",)),
        cost_estimate=pl.CostEstimate(
            flops=flops,
            transcendentals=B * n_actions,
            bytes_accessed=bytes_accessed),
    )(x_in, w1t, b1, w2t, b2, w3t, b3, scale, bias)

    return out[:B] if Bp != B else out


def init_params(key, n_states, n_actions, hidden):
    """Deterministic init mimicking torch.nn.Linear's U(-1/sqrt(fan_in), 1/sqrt(fan_in))."""
    def linear(k, fan_in, fan_out):
        kw, kb = jax.random.split(k)
        bound = 1.0 / jnp.sqrt(fan_in)
        # stored transposed: [in, out]
        w_t = jax.random.uniform(kw, (fan_in, fan_out), jnp.float32, -bound, bound)
        b = jax.random.uniform(kb, (1, fan_out), jnp.float32, -bound, bound)
        return w_t, b

    k1, k2, k3 = jax.random.split(key, 3)
    w1t, b1 = linear(k1, n_states, hidden)
    w2t, b2 = linear(k2, hidden, hidden)
    w3t, b3 = linear(k3, hidden, n_actions)
    scale = jnp.array([[1.5, 2.0]], dtype=jnp.float32)   # self.scale_factor
    bias = jnp.array([[-0.5, -1.0]], dtype=jnp.float32)  # self.bias_factor
    return (w1t, b1, w2t, b2, w3t, b3, scale, bias)


def _reference_forward(x, params):
    """Pure-JAX reference matching the PyTorch module."""
    w1t, b1, w2t, b2, w3t, b3, scale, bias = params
    h = x @ w1t + b1
    h = jnp.where(h > 0, h, NEG_SLOPE * h)
    h = h @ w2t + b2
    h = jnp.where(h > 0, h, NEG_SLOPE * h)
    y = jax.nn.sigmoid(h @ w3t + b3)
    return y[:, :scale.shape[1]] * scale + bias


if __name__ == "__main__":
    # Shapes consistent with the module: n_actions = 2 (forced by
    # scale_factor/bias_factor length).
    n_states, hidden, n_actions = 16, 32, 2

    key = jax.random.PRNGKey(0)
    kx, kp, kx2 = jax.random.split(key, 3)
    params = init_params(kp, n_states, n_actions, hidden)

    # Small-batch check (single grid step, full-array tile).
    B = 8
    x = jax.random.normal(kx, (B, n_states), dtype=jnp.float32)
    out = jax.block_until_ready(deterministic_policy_forward(x, params))
    ref = _reference_forward(x, params)
    assert out.shape == (B, n_actions)
    assert jnp.allclose(out, ref, atol=1e-5, rtol=1e-5), "mismatch vs reference (B=8)"

    # Larger-batch check exercising the batch grid + padding path (grid=(2,)).
    B2 = 1000
    x2 = jax.random.normal(kx2, (B2, n_states), dtype=jnp.float32)
    out2 = jax.block_until_ready(deterministic_policy_forward(x2, params))
    ref2 = _reference_forward(x2, params)
    assert out2.shape == (B2, n_actions)
    assert jnp.allclose(out2, ref2, atol=1e-5, rtol=1e-5), "mismatch vs reference (B=1000)"

    print("KERNEL_OK")
</pallas_src>

<mosaic_0001>
module attributes {stable_mosaic.version = 11 : i64} {
  func.func @_policy_kernel(%arg0: i32, %arg1: memref<8x16xf32, #tpu.memory_space<vmem>>, %arg2: memref<16x32xf32, #tpu.memory_space<vmem>>, %arg3: memref<1x32xf32, #tpu.memory_space<vmem>>, %arg4: memref<32x32xf32, #tpu.memory_space<vmem>>, %arg5: memref<1x32xf32, #tpu.memory_space<vmem>>, %arg6: memref<32x2xf32, #tpu.memory_space<vmem>>, %arg7: memref<1x2xf32, #tpu.memory_space<vmem>>, %arg8: memref<1x2xf32, #tpu.memory_space<vmem>>, %arg9: memref<1x2xf32, #tpu.memory_space<vmem>>, %arg10: memref<8x2xf32, #tpu.memory_space<vmem>>) attributes {dimension_semantics = [#tpu.dimension_semantics<parallel>], iteration_bounds = array<i64: 1>, scalar_prefetch = 0 : i64, scratch_operands = 0 : i64, tpu.core_type = #tpu.core_type<tc>, window_params = [{transform_indices = @transform_0, window_bounds = array<i64: 8, 16>}, {pipeline_mode = #tpu.pipeline_mode<synchronous>, transform_indices = @transform_1, window_bounds = array<i64: 16, 32>}, {pipeline_mode = #tpu.pipeline_mode<synchronous>, transform_indices = @transform_2, window_bounds = array<i64: 1, 32>}, {pipeline_mode = #tpu.pipeline_mode<synchronous>, transform_indices = @transform_3, window_bounds = array<i64: 32, 32>}, {pipeline_mode = #tpu.pipeline_mode<synchronous>, transform_indices = @transform_4, window_bounds = array<i64: 1, 32>}, {pipeline_mode = #tpu.pipeline_mode<synchronous>, transform_indices = @transform_5, window_bounds = array<i64: 32, 2>}, {pipeline_mode = #tpu.pipeline_mode<synchronous>, transform_indices = @transform_6, window_bounds = array<i64: 1, 2>}, {pipeline_mode = #tpu.pipeline_mode<synchronous>, transform_indices = @transform_7, window_bounds = array<i64: 1, 2>}, {pipeline_mode = #tpu.pipeline_mode<synchronous>, transform_indices = @transform_8, window_bounds = array<i64: 1, 2>}, {transform_indices = @transform_9, window_bounds = array<i64: 8, 2>}]} {
    %c0 = arith.constant 0 : index
    %c0_0 = arith.constant 0 : index
    %0 = vector.load %arg1[%c0, %c0_0] : memref<8x16xf32, #tpu.memory_space<vmem>>, vector<8x16xf32>
    %c0_1 = arith.constant 0 : index
    %c0_2 = arith.constant 0 : index
    %1 = vector.load %arg2[%c0_1, %c0_2] : memref<16x32xf32, #tpu.memory_space<vmem>>, vector<16x32xf32>
    %cst = arith.constant dense<0.000000e+00> : vector<8x32xf32>
    %2 = tpu.matmul %0, %1, %cst {dimension_numbers = #tpu.dot_dimension_numbers<[1], [0], [0], [1], [0, 0, 1, 1], [], []>} : vector<8x16xf32>, vector<16x32xf32>, vector<8x32xf32> -> vector<8x32xf32>
    %c0_3 = arith.constant 0 : index
    %c0_4 = arith.constant 0 : index
    %3 = vector.load %arg3[%c0_3, %c0_4] : memref<1x32xf32, #tpu.memory_space<vmem>>, vector<1x32xf32>
    %4 = vector.broadcast %3 : vector<1x32xf32> to vector<8x32xf32>
    %5 = arith.addf %2, %4 : vector<8x32xf32>
    %cst_5 = arith.constant 0.00999999977 : f32
    %6 = vector.broadcast %cst_5 : f32 to vector<8x32xf32>
    %7 = arith.mulf %6, %5 : vector<8x32xf32>
    %8 = arith.maximumf %5, %7 : vector<8x32xf32>
    %c0_6 = arith.constant 0 : index
    %c0_7 = arith.constant 0 : index
    %9 = vector.load %arg4[%c0_6, %c0_7] : memref<32x32xf32, #tpu.memory_space<vmem>>, vector<32x32xf32>
    %cst_8 = arith.constant dense<0.000000e+00> : vector<8x32xf32>
    %10 = tpu.matmul %8, %9, %cst_8 {dimension_numbers = #tpu.dot_dimension_numbers<[1], [0], [0], [1], [0, 0, 1, 1], [], []>} : vector<8x32xf32>, vector<32x32xf32>, vector<8x32xf32> -> vector<8x32xf32>
    %c0_9 = arith.constant 0 : index
    %c0_10 = arith.constant 0 : index
    %11 = vector.load %arg5[%c0_9, %c0_10] : memref<1x32xf32, #tpu.memory_space<vmem>>, vector<1x32xf32>
    %12 = vector.broadcast %11 : vector<1x32xf32> to vector<8x32xf32>
    %13 = arith.addf %10, %12 : vector<8x32xf32>
    %cst_11 = arith.constant 0.00999999977 : f32
    %14 = vector.broadcast %cst_11 : f32 to vector<8x32xf32>
    %15 = arith.mulf %14, %13 : vector<8x32xf32>
    %16 = arith.maximumf %13, %15 : vector<8x32xf32>
    %c0_12 = arith.constant 0 : index
    %c0_13 = arith.constant 0 : index
    %17 = vector.load %arg6[%c0_12, %c0_13] : memref<32x2xf32, #tpu.memory_space<vmem>>, vector<32x2xf32>
    %cst_14 = arith.constant dense<0.000000e+00> : vector<8x2xf32>
    %18 = tpu.matmul %16, %17, %cst_14 {dimension_numbers = #tpu.dot_dimension_numbers<[1], [0], [0], [1], [0, 0, 1, 1], [], []>} : vector<8x32xf32>, vector<32x2xf32>, vector<8x2xf32> -> vector<8x2xf32>
    %c0_15 = arith.constant 0 : index
    %c0_16 = arith.constant 0 : index
    %19 = vector.load %arg7[%c0_15, %c0_16] : memref<1x2xf32, #tpu.memory_space<vmem>>, vector<1x2xf32>
    %20 = vector.broadcast %19 : vector<1x2xf32> to vector<8x2xf32>
    %21 = arith.addf %18, %20 : vector<8x2xf32>
    %22 = arith.negf %21 : vector<8x2xf32>
    %23 = math.exp %22 : vector<8x2xf32>
    %cst_17 = arith.constant 1.000000e+00 : f32
    %24 = vector.broadcast %cst_17 : f32 to vector<8x2xf32>
    %25 = arith.addf %24, %23 : vector<8x2xf32>
    %26 = arith.divf %24, %25 : vector<8x2xf32>
    %c0_18 = arith.constant 0 : index
    %c0_19 = arith.constant 0 : index
    %27 = vector.load %arg8[%c0_18, %c0_19] : memref<1x2xf32, #tpu.memory_space<vmem>>, vector<1x2xf32>
    %28 = vector.broadcast %27 : vector<1x2xf32> to vector<8x2xf32>
    %29 = arith.mulf %26, %28 : vector<8x2xf32>
    %c0_20 = arith.constant 0 : index
    %c0_21 = arith.constant 0 : index
    %30 = vector.load %arg9[%c0_20, %c0_21] : memref<1x2xf32, #tpu.memory_space<vmem>>, vector<1x2xf32>
    %31 = vector.broadcast %30 : vector<1x2xf32> to vector<8x2xf32>
    %32 = arith.addf %29, %31 : vector<8x2xf32>
    %c0_22 = arith.constant 0 : index
    %c0_23 = arith.constant 0 : index
    %33 = vector.load %arg10[%c0_22, %c0_23] : memref<8x2xf32, #tpu.memory_space<vmem>>, vector<8x2xf32>
    tpu.vector_store %arg10[%c0_22, %c0_23], %32 {strides = array<i32>} : memref<8x2xf32, #tpu.memory_space<vmem>>, vector<8x2xf32>,
    return
  }
  func.func @transform_0(%arg0: i32) -> (i32, i32) {
    %c0_i32 = arith.constant 0 : i32
    %c0_i32_0 = arith.constant 0 : i32
    return %arg0, %c0_i32 : i32, i32
  }
  func.func @transform_1(%arg0: i32) -> (i32, i32) {
    %c0_i32 = arith.constant 0 : i32
    %c0_i32_0 = arith.constant 0 : i32
    %c0_i32_1 = arith.constant 0 : i32
    return %c0_i32, %c0_i32_0 : i32, i32
  }
  func.func @transform_2(%arg0: i32) -> (i32, i32) {
    %c0_i32 = arith.constant 0 : i32
    %c0_i32_0 = arith.constant 0 : i32
    %c0_i32_1 = arith.constant 0 : i32
    return %c0_i32, %c0_i32_0 : i32, i32
  }
  func.func @transform_3(%arg0: i32) -> (i32, i32) {
    %c0_i32 = arith.constant 0 : i32
    %c0_i32_0 = arith.constant 0 : i32
    %c0_i32_1 = arith.constant 0 : i32
    return %c0_i32, %c0_i32_0 : i32, i32
  }
  func.func @transform_4(%arg0: i32) -> (i32, i32) {
    %c0_i32 = arith.constant 0 : i32
    %c0_i32_0 = arith.constant 0 : i32
    %c0_i32_1 = arith.constant 0 : i32
    return %c0_i32, %c0_i32_0 : i32, i32
  }
  func.func @transform_5(%arg0: i32) -> (i32, i32) {
    %c0_i32 = arith.constant 0 : i32
    %c0_i32_0 = arith.constant 0 : i32
    %c0_i32_1 = arith.constant 0 : i32
    return %c0_i32, %c0_i32_0 : i32, i32
  }
  func.func @transform_6(%arg0: i32) -> (i32, i32) {
    %c0_i32 = arith.constant 0 : i32
    %c0_i32_0 = arith.constant 0 : i32
    %c0_i32_1 = arith.constant 0 : i32
    return %c0_i32, %c0_i32_0 : i32, i32
  }
  func.func @transform_7(%arg0: i32) -> (i32, i32) {
    %c0_i32 = arith.constant 0 : i32
    %c0_i32_0 = arith.constant 0 : i32
    %c0_i32_1 = arith.constant 0 : i32
    return %c0_i32, %c0_i32_0 : i32, i32
  }
  func.func @transform_8(%arg0: i32) -> (i32, i32) {
    %c0_i32 = arith.constant 0 : i32
    %c0_i32_0 = arith.constant 0 : i32
    %c0_i32_1 = arith.constant 0 : i32
    return %c0_i32, %c0_i32_0 : i32, i32
  }
  func.func @transform_9(%arg0: i32) -> (i32, i32) {
    %c0_i32 = arith.constant 0 : i32
    %c0_i32_0 = arith.constant 0 : i32
    return %arg0, %c0_i32 : i32, i32
  }
}

</mosaic_0001>

<llo_original>
// kernel: tpu_custom_call.1
$region0: #{tpu_custom_call.1}
  #allocation0 [shape = 'u32[]', space=smem, size = 0x4, offset = 0x4, fixed_abs, tag = 'smem constant byte address 0x4 - core index']
  #allocation1 [shape = 'u32[144,128]{1,0:T(1,128)}', space=vmem, size = 0x12000, scoped, tag = 'internal scratch']
  %s0 = inlined_call_operand.vmem [shape: f32[8,16], index: 0, kind: input, shape index: {}]
  %s1 = inlined_call_operand.hbm [shape: f32[16,32], index: 1, kind: input, shape index: {}]
  %s2 = inlined_call_operand.vmem [shape: f32[1,32], index: 2, kind: input, shape index: {}]
  %s3 = inlined_call_operand.vmem [shape: f32[32,32], index: 3, kind: input, shape index: {}]
  %s4 = inlined_call_operand.vmem [shape: f32[1,32], index: 4, kind: input, shape index: {}]
  %s5 = inlined_call_operand.vmem [shape: f32[32,2], index: 5, kind: input, shape index: {}]
  %s6 = inlined_call_operand.vmem [shape: f32[1,2], index: 6, kind: input, shape index: {}]
  %s7 = inlined_call_operand.vmem [shape: f32[1,2], index: 7, kind: input, shape index: {}]
  %s8 = inlined_call_operand.vmem [shape: f32[1,2], index: 8, kind: input, shape index: {}]
  %s9 = inlined_call_operand.vmem [shape: f32[8,2], index: 9, kind: output, shape index: {}]
  %s10 = sld [smem:[#allocation0]]
  $region50: #{tpu_custom_call.1} parent=0
    _
  %s12 = ssub.s32 1, %s10
  %s13 = scalar_select 0, %s12, %s10
  $region1: #{tpu_custom_call.1} parent=0
    #allocation2 [shape = 'u8[8192]{0}', space=vmem, size = 0x2000, scoped, tag = 'input window, operand 1, single buffered']
    #allocation3 [shape = 's32[1]{0}', space=sflag, size = 0x4, scoped, tag = 'scoped memory for tpu_custom_call.1']
    %14 = vsyncpa [#allocation3], 0
    // Predicated region
    $region2: #{tpu_custom_call.1} parent=1 // pred_check
      _
    $region3: #{tpu_custom_call.1} parent=1 // pred_check_branch
      %16 = sbr.rel (0) target = $region5
    $region4: #{tpu_custom_call.1} parent=1 // pred_region
      _
    $region5: #{tpu_custom_call.1} parent=1 // pred_fallthru
      _
    // Predicated region
    $region6: #{tpu_custom_call.1} parent=1 // pred_check
      _
    $region7: #{tpu_custom_call.1} parent=1 // pred_check_branch
      %18 = sbr.rel (0) target = $region9
    $region8: #{tpu_custom_call.1} parent=1 // pred_region
      %s20 = ssub.s32 256, 256
      %21 = vsyncadd [#allocation3], %s20
      %s22 = sshll.u32 [#allocation2], 4
      %s23 = int_to_ptr.vmem [resolvable:$true] %s22
      %28 = dma.hbm_to_vmem [thread:$0]  %s1, 256, %s23, [#allocation3], 128, 128, 8
    $region9: #{tpu_custom_call.1} parent=1 // pred_fallthru
      _
    // Predicated region
    $region10: #{tpu_custom_call.1} parent=1 // pred_check
      _
    $region11: #{tpu_custom_call.1} parent=1 // pred_check_branch
      %30 = sbr.rel (0) target = $region13
    $region12: #{tpu_custom_call.1} parent=1 // pred_region
      _
    $region13: #{tpu_custom_call.1} parent=1 // pred_fallthru
      _
    // Predicated region
    $region14: #{tpu_custom_call.1} parent=1 // pred_check
      _
    $region15: #{tpu_custom_call.1} parent=1 // pred_check_branch
      %32 = sbr.rel (0) target = $region17
    $region16: #{tpu_custom_call.1} parent=1 // pred_region
      _
    $region17: #{tpu_custom_call.1} parent=1 // pred_fallthru
      _
    // Predicated region
    $region18: #{tpu_custom_call.1} parent=1 // pred_check
      _
    $region19: #{tpu_custom_call.1} parent=1 // pred_check_branch
      %34 = sbr.rel (0) target = $region21
    $region20: #{tpu_custom_call.1} parent=1 // pred_region
      _
    $region21: #{tpu_custom_call.1} parent=1 // pred_fallthru
      _
    // Predicated region
    $region22: #{tpu_custom_call.1} parent=1 // pred_check
      _
    $region23: #{tpu_custom_call.1} parent=1 // pred_check_branch
      %36 = sbr.rel (0) target = $region25
    $region24: #{tpu_custom_call.1} parent=1 // pred_region
      _
    $region25: #{tpu_custom_call.1} parent=1 // pred_fallthru
      _
    // Predicated region
    $region26: #{tpu_custom_call.1} parent=1 // pred_check
      _
    $region27: #{tpu_custom_call.1} parent=1 // pred_check_branch
      %38 = sbr.rel (0) target = $region29
    $region28: #{tpu_custom_call.1} parent=1 // pred_region
      _
    $region29: #{tpu_custom_call.1} parent=1 // pred_fallthru
      _
    // Predicated region
    $region30: #{tpu_custom_call.1} parent=1 // pred_check
      _
    $region31: #{tpu_custom_call.1} parent=1 // pred_check_branch
      %40 = sbr.rel (0) target = $region33
    $region32: #{tpu_custom_call.1} parent=1 // pred_region
      _
    $region33: #{tpu_custom_call.1} parent=1 // pred_fallthru
      _
    // Predicated region
    $region34: #{tpu_custom_call.1} parent=1 // pred_check
      _
    $region35: #{tpu_custom_call.1} parent=1 // pred_check_branch
      %42 = sbr.rel (0) target = $region37
    $region36: #{tpu_custom_call.1} parent=1 // pred_region
      _
    $region37: #{tpu_custom_call.1} parent=1 // pred_fallthru
      _
    // Predicated region
    $region38: #{tpu_custom_call.1} parent=1 // pred_check
      _
    $region39: #{tpu_custom_call.1} parent=1 // pred_check_branch
      %44 = sbr.rel (0) target = $region41
    $region40: #{tpu_custom_call.1} parent=1 // pred_region
      %45 = dma.done [#allocation3], 256
    $region41: #{tpu_custom_call.1} parent=1 // pred_fallthru
      _
    %v46 = vld [vmem:[%s0] sm:$0xff]
    %v47 = vld [vmem:[#allocation2] sm:$0xff]
    %v48 = vld [vmem:[#allocation2 + $0x8] sm:$0xff]
    %v49 = vld [vmem:[%s2] sm:$0x1]
    %v51 = vlaneseq
    %v52 = vshrl.u32 %v51, 7
    %v53 = vsub.s32 0, %v52
    %v54 = vrot.slane %v49, %v53
    %vm56 = vcmask 130048
    %v58 = vsel %vm56, %v46, 0
    %60 = vmatprep.subr.mxu0 0.0
    %61 = vmatpush1.msra.mxu0 %v47
    %62 = vmatprep.subr.mxu0 0.0
    %63 = vmatpush1.msra.mxu0 %v48
    %64 = vmatprep.subr.mxu0 0.0
    %65 = vmatpush1.msra.mxu0 0.0
    %66 = vmatprep.subr.mxu0 0.0
    %67 = vmatpush1.msra.mxu0 0.0
    %68 = vmatprep.subr.mxu0 0.0
    %69 = vmatpush1.msra.mxu0 0.0
    %70 = vmatprep.subr.mxu0 0.0
    %71 = vmatpush1.msra.mxu0 0.0
    %72 = vmatprep.subr.mxu0 0.0
    %73 = vmatpush1.msra.mxu0 0.0
    %74 = vmatprep.subr.mxu0 0.0
    %75 = vmatpush1.msra.mxu0 0.0
    %76 = vmatprep.subr.mxu0 0.0
    %77 = vmatpush1.msra.mxu0 0.0
    %78 = vmatprep.subr.mxu0 0.0
    %79 = vmatpush1.msra.mxu0 0.0
    %80 = vmatprep.subr.mxu0 0.0
    %81 = vmatpush1.msra.mxu0 0.0
    %82 = vmatprep.subr.mxu0 0.0
    %83 = vmatpush1.msra.mxu0 0.0
    %84 = vmatprep.subr.mxu0 0.0
    %85 = vmatpush1.msra.mxu0 0.0
    %86 = vmatprep.subr.mxu0 0.0
    %87 = vmatpush1.msra.mxu0 0.0
    %88 = vmatprep.subr.mxu0 0.0
    %89 = vmatpush1.msra.mxu0 0.0
    %90 = vmatprep.subr.mxu0 0.0
    %91 = vmatpush1.msra.mxu0 0.0
    %92 = vmatprep.subr.mxu0 0.0
    %93 = vmatpush1.msra.mxu0 0.0
    %94 = vmatprep.subr.mxu0 0.0
    %95 = vmatpush1.msra.mxu0 0.0
    %96 = vmatprep.subr.mxu0 0.0
    %97 = vmatpush1.msra.mxu0 0.0
    %98 = vmatprep.subr.mxu0 0.0
    %99 = vmatpush1.msra.mxu0 0.0
    %100 = vmatprep.subr.mxu0 0.0
    %101 = vmatpush1.msra.mxu0 0.0
    %102 = vmatprep.subr.mxu0 0.0
    %103 = vmatpush1.msra.mxu0 0.0
    %104 = vmatprep.subr.mxu0 0.0
    %105 = vmatpush1.msra.mxu0 0.0
    %106 = vmatprep.subr.mxu0 0.0
    %107 = vmatpush1.msra.mxu0 0.0
    %108 = vmatprep.subr.mxu0 0.0
    %109 = vmatpush1.msra.mxu0 0.0
    %110 = vmatprep.subr.mxu0 0.0
    %111 = vmatpush1.msra.mxu0 0.0
    %112 = vmatprep.subr.mxu0 0.0
    %113 = vmatpush1.msra.mxu0 0.0
    %114 = vmatprep.subr.mxu0 0.0
    %115 = vmatpush1.msra.mxu0 0.0
    %116 = vmatprep.subr.mxu0 0.0
    %117 = vmatpush1.msra.mxu0 0.0
    %118 = vmatprep.subr.mxu0 0.0
    %119 = vmatpush1.msra.mxu0 0.0
    %120 = vmatprep.subr.mxu0 0.0
    %121 = vmatpush1.msra.mxu0 0.0
    %122 = vmatprep.subr.mxu0 0.0
    %123 = vmatpush1.msra.mxu0 0.0
    %124 = vmatprep.mubr.f32.mxu0 0.0
    %125 = vmatmul.mubr.f32.gmra.mrb[0].mxu0 %v58
    %v126 = vpop.f32.mrb[0].mxu0
    %v127 = vadd.f32 %v54, %v126
    %v128 = vpop.f32.mrb[0].mxu0
    %129 = vdwg.mxu0
    %v130 = vmul.f32 %v127, 0.01
    %v131 = vmax.f32 %v127, %v130
    %v132 = vld [vmem:[%s3] sm:$0xff]
    %v133 = vld [vmem:[%s3 + $0x8] sm:$0xff]
    %v134 = vld [vmem:[%s3 + $0x10] sm:$0xff]
    %v135 = vld [vmem:[%s3 + $0x18] sm:$0xff]
    %v136 = vld [vmem:[%s4] sm:$0x1]
    %v138 = vlaneseq
    %v139 = vshrl.u32 %v138, 7
    %v140 = vsub.s32 0, %v139
    %v141 = vrot.slane %v136, %v140
    %vm143 = vcmask 261120
    %v145 = vsel %vm143, %v131, 0
    %147 = vmatprep.subr.mxu0 0.0
    %148 = vmatpush1.msra.mxu0 %v132
    %149 = vmatprep.subr.mxu0 0.0
    %150 = vmatpush1.msra.mxu0 %v133
    %151 = vmatprep.subr.mxu0 0.0
    %152 = vmatpush1.msra.mxu0 %v134
    %153 = vmatprep.subr.mxu0 0.0
    %154 = vmatpush1.msra.mxu0 %v135
    %155 = vmatprep.subr.mxu0 0.0
    %156 = vmatpush1.msra.mxu0 0.0
    %157 = vmatprep.subr.mxu0 0.0
    %158 = vmatpush1.msra.mxu0 0.0
    %159 = vmatprep.subr.mxu0 0.0
    %160 = vmatpush1.msra.mxu0 0.0
    %161 = vmatprep.subr.mxu0 0.0
    %162 = vmatpush1.msra.mxu0 0.0
    %163 = vmatprep.subr.mxu0 0.0
    %164 = vmatpush1.msra.mxu0 0.0
    %165 = vmatprep.subr.mxu0 0.0
    %166 = vmatpush1.msra.mxu0 0.0
    %167 = vmatprep.subr.mxu0 0.0
    %168 = vmatpush1.msra.mxu0 0.0
    %169 = vmatprep.subr.mxu0 0.0
    %170 = vmatpush1.msra.mxu0 0.0
    %171 = vmatprep.subr.mxu0 0.0
    %172 = vmatpush1.msra.mxu0 0.0
    %173 = vmatprep.subr.mxu0 0.0
    %174 = vmatpush1.msra.mxu0 0.0
    %175 = vmatprep.subr.mxu0 0.0
    %176 = vmatpush1.msra.mxu0 0.0
    %177 = vmatprep.subr.mxu0 0.0
    %178 = vmatpush1.msra.mxu0 0.0
    %179 = vmatprep.subr.mxu0 0.0
    %180 = vmatpush1.msra.mxu0 0.0
    %181 = vmatprep.subr.mxu0 0.0
    %182 = vmatpush1.msra.mxu0 0.0
    %183 = vmatprep.subr.mxu0 0.0
    %184 = vmatpush1.msra.mxu0 0.0
    %185 = vmatprep.subr.mxu0 0.0
    %186 = vmatpush1.msra.mxu0 0.0
    %187 = vmatprep.subr.mxu0 0.0
    %188 = vmatpush1.msra.mxu0 0.0
    %189 = vmatprep.subr.mxu0 0.0
    %190 = vmatpush1.msra.mxu0 0.0
    %191 = vmatprep.subr.mxu0 0.0
    %192 = vmatpush1.msra.mxu0 0.0
    %193 = vmatprep.subr.mxu0 0.0
    %194 = vmatpush1.msra.mxu0 0.0
    %195 = vmatprep.subr.mxu0 0.0
    %196 = vmatpush1.msra.mxu0 0.0
    %197 = vmatprep.subr.mxu0 0.0
    %198 = vmatpush1.msra.mxu0 0.0
    %199 = vmatprep.subr.mxu0 0.0
    %200 = vmatpush1.msra.mxu0 0.0
    %201 = vmatprep.subr.mxu0 0.0
    %202 = vmatpush1.msra.mxu0 0.0
    %203 = vmatprep.subr.mxu0 0.0
    %204 = vmatpush1.msra.mxu0 0.0
    %205 = vmatprep.subr.mxu0 0.0
    %206 = vmatpush1.msra.mxu0 0.0
    %207 = vmatprep.subr.mxu0 0.0
    %208 = vmatpush1.msra.mxu0 0.0
    %209 = vmatprep.subr.mxu0 0.0
    %210 = vmatpush1.msra.mxu0 0.0
    %211 = vmatprep.mubr.f32.mxu0 0.0
    %212 = vmatmul.mubr.f32.gmra.mrb[0].mxu0 %v145
    %v213 = vpop.f32.mrb[0].mxu0
    %v214 = vadd.f32 %v141, %v213
    %v215 = vpop.f32.mrb[0].mxu0
    %216 = vdwg.mxu0
    %v217 = vmul.f32 %v214, 0.01
    %v218 = vmax.f32 %v214, %v217
    %v219 = vld [vmem:[%s5] sm:$0xff]
    %v220 = vld [vmem:[%s5 + $0x8] sm:$0xff]
    %v221 = vld [vmem:[%s5 + $0x10] sm:$0xff]
    %v222 = vld [vmem:[%s5 + $0x18] sm:$0xff]
    %v223 = vld [vmem:[%s6] sm:$0x1]
    %v225 = vlaneseq
    %v226 = vshrl.u32 %v225, 7
    %v227 = vsub.s32 0, %v226
    %v228 = vrot.slane %v223, %v227
    %v231 = vsel %vm143, %v218, 0
    %233 = vmatprep.subr.mxu0 0.0
    %234 = vmatpush1.msra.mxu0 %v219
    %235 = vmatprep.subr.mxu0 0.0
    %236 = vmatpush1.msra.mxu0 %v220
    %237 = vmatprep.subr.mxu0 0.0
    %238 = vmatpush1.msra.mxu0 %v221
    %239 = vmatprep.subr.mxu0 0.0
    %240 = vmatpush1.msra.mxu0 %v222
    %241 = vmatprep.subr.mxu0 0.0
    %242 = vmatpush1.msra.mxu0 0.0
    %243 = vmatprep.subr.mxu0 0.0
    %244 = vmatpush1.msra.mxu0 0.0
    %245 = vmatprep.subr.mxu0 0.0
    %246 = vmatpush1.msra.mxu0 0.0
    %247 = vmatprep.subr.mxu0 0.0
    %248 = vmatpush1.msra.mxu0 0.0
    %249 = vmatprep.subr.mxu0 0.0
    %250 = vmatpush1.msra.mxu0 0.0
    %251 = vmatprep.subr.mxu0 0.0
    %252 = vmatpush1.msra.mxu0 0.0
    %253 = vmatprep.subr.mxu0 0.0
    %254 = vmatpush1.msra.mxu0 0.0
    %255 = vmatprep.subr.mxu0 0.0
    %256 = vmatpush1.msra.mxu0 0.0
    %257 = vmatprep.subr.mxu0 0.0
    %258 = vmatpush1.msra.mxu0 0.0
    %259 = vmatprep.subr.mxu0 0.0
    %260 = vmatpush1.msra.mxu0 0.0
    %261 = vmatprep.subr.mxu0 0.0
    %262 = vmatpush1.msra.mxu0 0.0
    %263 = vmatprep.subr.mxu0 0.0
    %264 = vmatpush1.msra.mxu0 0.0
    %265 = vmatprep.subr.mxu0 0.0
    %266 = vmatpush1.msra.mxu0 0.0
    %267 = vmatprep.subr.mxu0 0.0
    %268 = vmatpush1.msra.mxu0 0.0
    %269 = vmatprep.subr.mxu0 0.0
    %270 = vmatpush1.msra.mxu0 0.0
    %271 = vmatprep.subr.mxu0 0.0
    %272 = vmatpush1.msra.mxu0 0.0
    %273 = vmatprep.subr.mxu0 0.0
    %274 = vmatpush1.msra.mxu0 0.0
    %275 = vmatprep.subr.mxu0 0.0
    %276 = vmatpush1.msra.mxu0 0.0
    %277 = vmatprep.subr.mxu0 0.0
    %278 = vmatpush1.msra.mxu0 0.0
    %279 = vmatprep.subr.mxu0 0.0
    %280 = vmatpush1.msra.mxu0 0.0
    %281 = vmatprep.subr.mxu0 0.0
    %282 = vmatpush1.msra.mxu0 0.0
    %283 = vmatprep.subr.mxu0 0.0
    %284 = vmatpush1.msra.mxu0 0.0
    %285 = vmatprep.subr.mxu0 0.0
    %286 = vmatpush1.msra.mxu0 0.0
    %287 = vmatprep.subr.mxu0 0.0
    %288 = vmatpush1.msra.mxu0 0.0
    %289 = vmatprep.subr.mxu0 0.0
    %290 = vmatpush1.msra.mxu0 0.0
    %291 = vmatprep.subr.mxu0 0.0
    %292 = vmatpush1.msra.mxu0 0.0
    %293 = vmatprep.subr.mxu0 0.0
    %294 = vmatpush1.msra.mxu0 0.0
    %295 = vmatprep.subr.mxu0 0.0
    %296 = vmatpush1.msra.mxu0 0.0
    %297 = vmatprep.mubr.f32.mxu0 0.0
    %298 = vmatmul.mubr.f32.gmra.mrb[0].mxu0 %v231
    %v299 = vpop.f32.mrb[0].mxu0
    %v300 = vadd.f32 %v228, %v299
    %v301 = vpop.f32.mrb[0].mxu0
    %302 = vdwg.mxu0
    %v303 = vxor.u32 %v300, 2147483648
    %v304 = vmul.f32 %v303, 1.442695
    %v305 = vpow.pop %v304
    %v306 = vadd.f32 %v305, 1.0
    %v307 = vrcp.pop %v306
    %v308 = vmul.f32 1.0, %v307
    %v309 = vld [vmem:[%s7] sm:$0x1]
    %v311 = vlaneseq
    %v312 = vshrl.u32 %v311, 7
    %v313 = vsub.s32 0, %v312
    %v314 = vrot.slane %v309, %v313
    %v316 = vmul.f32 %v308, %v314
    %v317 = vld [vmem:[%s8] sm:$0x1]
    %v319 = vlaneseq
    %v320 = vshrl.u32 %v319, 7
    %v321 = vsub.s32 0, %v320
    %v322 = vrot.slane %v317, %v321
    %v324 = vadd.f32 %v316, %v322
    %vm325 = vcmask 15360
    %326 = vst.msk [vmem:[%s9] sm:$0xff] %vm325, %v324
    // Predicated region
    $region42: #{tpu_custom_call.1} parent=1 // pred_check
      _
    $region43: #{tpu_custom_call.1} parent=1 // pred_check_branch
      %328 = sbr.rel (0) target = $region45
    $region44: #{tpu_custom_call.1} parent=1 // pred_region
      _
    $region45: #{tpu_custom_call.1} parent=1 // pred_fallthru
      _
    // Predicated region
    $region46: #{tpu_custom_call.1} parent=1 // pred_check
      _
    $region47: #{tpu_custom_call.1} parent=1 // pred_check_branch
      %330 = sbr.rel (0) target = $region49
    $region48: #{tpu_custom_call.1} parent=1 // pred_region
      _
    $region49: #{tpu_custom_call.1} parent=1 // pred_fallthru
      _
    %331 = vsyncpa [#allocation3], 1

</llo_original>
